<compile_context>
chip_gen: v5e
topology: v5e:2x2
jax: 0.10.0
libtpu: 0.0.40
codegen_flags: <defaults>
</compile_context>

<pallas_src>
import functools

import jax
import jax.numpy as jnp
from jax.experimental import pallas as pl
from jax.experimental.pallas import tpu as pltpu

H1, H2 = 400, 300            # logical hidden sizes (PyTorch module)
H1_PAD, H2_PAD = 512, 384    # lane-dense padded hidden sizes (multiples of 128)


def _round_up(x, m):
    return ((x + m - 1) // m) * m


def _actor_kernel(max_action, a_pad, x_ref, w1_ref, w2_ref, w3_ref, b_ref, o_ref):
    # x_ref:  [Bt, S]        f32
    # w1_ref: [S, 512]       bf16   (cols 400:512 zero)
    # w2_ref: [512, 384]     bf16   (rows 400:, cols 300: zero)
    # w3_ref: [384, a_pad]   bf16   (rows 300:, cols action_dim: zero)
    # b_ref:  [3, 512]       f32    (packed, zero-padded biases)
    # o_ref:  [Bt, a_pad]    f32
    x = x_ref[...].astype(jnp.bfloat16)
    b = b_ref[...]                                         # [3, 512] f32

    h1 = jnp.dot(x, w1_ref[...], preferred_element_type=jnp.float32)
    h1 = jnp.maximum(h1 + b[0:1, :], 0.0)                  # [Bt, 512]

    h2 = jnp.dot(h1.astype(jnp.bfloat16), w2_ref[...],
                 preferred_element_type=jnp.float32)
    h2 = jnp.maximum(h2 + b[1:2, :H2_PAD], 0.0)            # [Bt, 384]

    y = jnp.dot(h2.astype(jnp.bfloat16), w3_ref[...],
                preferred_element_type=jnp.float32)
    y = y + b[2:3, :a_pad]                                 # [Bt, a_pad]

    o_ref[...] = max_action * jnp.tanh(y)


def prepare_params(params, state_dim, action_dim):
    """One-time prep: pad to lane-dense shapes, cast weights to bf16, pack biases."""
    w1, b1, w2, b2, w3, b3 = params
    a_pad = _round_up(max(action_dim, 128), 128)

    w1p = jnp.pad(w1, ((0, 0), (0, H1_PAD - H1))).astype(jnp.bfloat16)
    w2p = jnp.pad(w2, ((0, H1_PAD - H1), (0, H2_PAD - H2))).astype(jnp.bfloat16)
    w3p = jnp.pad(w3, ((0, H2_PAD - H2), (0, a_pad - action_dim))).astype(jnp.bfloat16)

    bias = jnp.zeros((3, H1_PAD), jnp.float32)
    bias = bias.at[0, :H1].set(b1.reshape(-1))
    bias = bias.at[1, :H2].set(b2.reshape(-1))
    bias = bias.at[2, :action_dim].set(b3.reshape(-1))
    return (w1p, w2p, w3p, bias)


def _choose_batch_tile(B):
    """Batch-tile sizing per the perf review (v5e / v6e / v7x)."""
    if B > 512:
        # Large B: big 256-multiple tiles to amortize per-step pipeline overhead
        # and keep the MXU M dimension a full multiple of 256 (v6e/v7x).
        return min(1024, _round_up(B, 256))
    if B >= 128:
        # Medium B: always >= 2 grid steps so both v7x TensorCores get work.
        return max(8, _round_up(-(-B // 2), 8))
    # Small B: single tile, sublane-aligned.
    return _round_up(max(B, 1), 8)


@functools.partial(jax.jit, static_argnames=("max_action", "action_dim"))
def actor_forward(x, prepared, *, max_action, action_dim):
    """x: [B, state_dim] f32 -> action: [B, action_dim] f32."""
    w1p, w2p, w3p, bias = prepared
    B, S = x.shape
    a_pad = w3p.shape[1]

    b_tile = _choose_batch_tile(B)
    grid = (pl.cdiv(B, b_tile),)

    # Only needed once tiles grow past ~512 rows (v5e default scoped VMEM = 16 MiB);
    # 32 MiB is safely below every generation's physical VMEM (64 MiB on v7x).
    vmem_limit = 32 * 1024 * 1024 if b_tile > 256 else None

    # Advisory cost hint so XLA schedules neighbouring ops around this call.
    flops = 2 * B * (S * H1_PAD + H1_PAD * H2_PAD + H2_PAD * a_pad)
    transcendentals = B * a_pad
    bytes_accessed = (B * S * 4                      # x
                      + S * H1_PAD * 2               # w1 (bf16)
                      + H1_PAD * H2_PAD * 2          # w2 (bf16)
                      + H2_PAD * a_pad * 2           # w3 (bf16)
                      + 3 * H1_PAD * 4               # packed biases
                      + B * a_pad * 4)               # output

    # Weights/bias have constant index_maps: fetched once, single-buffered.
    resident = pl.Buffered(1)

    out = pl.pallas_call(
        functools.partial(_actor_kernel, float(max_action), a_pad),
        out_shape=jax.ShapeDtypeStruct((B, a_pad), jnp.float32),
        grid=grid,
        in_specs=[
            pl.BlockSpec((b_tile, S), lambda i: (i, 0)),          # x: tiled over B
            pl.BlockSpec((S, H1_PAD), lambda i: (0, 0),
                         pipeline_mode=resident),                 # weights stay
            pl.BlockSpec((H1_PAD, H2_PAD), lambda i: (0, 0),
                         pipeline_mode=resident),                 #  VMEM-resident
            pl.BlockSpec((H2_PAD, a_pad), lambda i: (0, 0),
                         pipeline_mode=resident),                 #  across grid
            pl.BlockSpec((3, H1_PAD), lambda i: (0, 0),
                         pipeline_mode=resident),                 # packed biases
        ],
        out_specs=pl.BlockSpec((b_tile, a_pad), lambda i: (i, 0)),
        compiler_params=pltpu.CompilerParams(
            dimension_semantics=("parallel",),   # shard batch across TCs on v7x
            vmem_limit_bytes=vmem_limit,
        ),
        cost_estimate=pl.CostEstimate(
            flops=flops,
            transcendentals=transcendentals,
            bytes_accessed=bytes_accessed,
        ),
    )(x, w1p, w2p, w3p, bias)

    return out[:, :action_dim]


def init_params(key, state_dim, action_dim):
    """Deterministic init mimicking PyTorch nn.Linear default U[-1/sqrt(fan_in), +]."""
    def linear(k, fan_in, fan_out):
        kw, kb = jax.random.split(k)
        bound = 1.0 / jnp.sqrt(fan_in)
        # stored as [in, out] so the kernel computes x @ W
        w = jax.random.uniform(kw, (fan_in, fan_out), jnp.float32, -bound, bound)
        b = jax.random.uniform(kb, (1, fan_out), jnp.float32, -bound, bound)
        return w, b

    k1, k2, k3 = jax.random.split(key, 3)
    w1, b1 = linear(k1, state_dim, H1)
    w2, b2 = linear(k2, H1, H2)
    w3, b3 = linear(k3, H2, action_dim)
    return (w1, b1, w2, b2, w3, b3)


def _reference(x, params, max_action):
    """Pure-JAX f32 reference of the PyTorch forward."""
    w1, b1, w2, b2, w3, b3 = params
    h1 = jnp.maximum(x @ w1 + b1, 0.0)
    h2 = jnp.maximum(h1 @ w2 + b2, 0.0)
    return max_action * jnp.tanh(h2 @ w3 + b3)


if __name__ == "__main__":
    state_dim, action_dim = 16, 8
    max_action = 1.0

    key = jax.random.PRNGKey(0)
    k_x1, k_x2, k_p = jax.random.split(key, 3)
    params = init_params(k_p, state_dim, action_dim)
    prepared = prepare_params(params, state_dim, action_dim)

    # 1) Small RL-style batch (single tile, grid=(1,)).
    x_small = jax.random.normal(k_x1, (8, state_dim), jnp.float32)
    act_small = jax.block_until_ready(
        actor_forward(x_small, prepared, max_action=max_action, action_dim=action_dim))
    ref_small = _reference(x_small, params, max_action)
    assert act_small.shape == (8, action_dim)
    assert jnp.allclose(act_small, ref_small, atol=3e-2, rtol=3e-2)

    # 2) Medium batch: exercises the >=2-tile path (v7x dual-TC split) and a
    #    partial final batch tile (garbage rows masked on write).
    x_med = jax.random.normal(k_x2, (200, state_dim), jnp.float32)
    act_med = jax.block_until_ready(
        actor_forward(x_med, prepared, max_action=max_action, action_dim=action_dim))
    ref_med = _reference(x_med, params, max_action)
    assert act_med.shape == (200, action_dim)
    assert jnp.allclose(act_med, ref_med, atol=3e-2, rtol=3e-2)

    print("KERNEL_OK")
</pallas_src>

<mosaic_0001>
module attributes {stable_mosaic.version = 11 : i64} {
  func.func @_actor_kernel(%arg0: i32, %arg1: memref<8x16xf32, #tpu.memory_space<vmem>>, %arg2: memref<16x512xbf16, #tpu.memory_space<vmem>>, %arg3: memref<512x384xbf16, #tpu.memory_space<vmem>>, %arg4: memref<384x128xbf16, #tpu.memory_space<vmem>>, %arg5: memref<3x512xf32, #tpu.memory_space<vmem>>, %arg6: memref<8x128xf32, #tpu.memory_space<vmem>>) attributes {dimension_semantics = [#tpu.dimension_semantics<parallel>], iteration_bounds = array<i64: 1>, scalar_prefetch = 0 : i64, scratch_operands = 0 : i64, tpu.core_type = #tpu.core_type<tc>, window_params = [{transform_indices = @transform_0, window_bounds = array<i64: 8, 16>}, {pipeline_mode = #tpu.pipeline_mode<synchronous>, transform_indices = @transform_1, window_bounds = array<i64: 16, 512>}, {pipeline_mode = #tpu.pipeline_mode<synchronous>, transform_indices = @transform_2, window_bounds = array<i64: 512, 384>}, {pipeline_mode = #tpu.pipeline_mode<synchronous>, transform_indices = @transform_3, window_bounds = array<i64: 384, 128>}, {pipeline_mode = #tpu.pipeline_mode<synchronous>, transform_indices = @transform_4, window_bounds = array<i64: 3, 512>}, {transform_indices = @transform_5, window_bounds = array<i64: 8, 128>}]} {
    %c0 = arith.constant 0 : index
    %c0_0 = arith.constant 0 : index
    %0 = vector.load %arg1[%c0, %c0_0] : memref<8x16xf32, #tpu.memory_space<vmem>>, vector<8x16xf32>
    %1 = arith.truncf %0 : vector<8x16xf32> to vector<8x16xbf16>
    %c0_1 = arith.constant 0 : index
    %c0_2 = arith.constant 0 : index
    %2 = vector.load %arg5[%c0_1, %c0_2] : memref<3x512xf32, #tpu.memory_space<vmem>>, vector<3x512xf32>
    %c0_3 = arith.constant 0 : index
    %c0_4 = arith.constant 0 : index
    %3 = vector.load %arg2[%c0_3, %c0_4] : memref<16x512xbf16, #tpu.memory_space<vmem>>, vector<16x512xbf16>
    %cst = arith.constant dense<0.000000e+00> : vector<8x512xf32>
    %4 = tpu.matmul %1, %3, %cst {dimension_numbers = #tpu.dot_dimension_numbers<[1], [0], [0], [1], [0, 0, 1, 1], [], []>} : vector<8x16xbf16>, vector<16x512xbf16>, vector<8x512xf32> -> vector<8x512xf32>
    %5 = vector.extract_strided_slice %2 {offsets = [0, 0], sizes = [1, 512], strides = [1, 1]} : vector<3x512xf32> to vector<1x512xf32>
    %6 = vector.broadcast %5 : vector<1x512xf32> to vector<8x512xf32>
    %7 = arith.addf %4, %6 : vector<8x512xf32>
    %cst_5 = arith.constant 0.000000e+00 : f32
    %8 = vector.broadcast %cst_5 : f32 to vector<8x512xf32>
    %9 = arith.maximumf %7, %8 : vector<8x512xf32>
    %10 = arith.truncf %9 : vector<8x512xf32> to vector<8x512xbf16>
    %c0_6 = arith.constant 0 : index
    %c0_7 = arith.constant 0 : index
    %11 = vector.load %arg3[%c0_6, %c0_7] : memref<512x384xbf16, #tpu.memory_space<vmem>>, vector<512x384xbf16>
    %cst_8 = arith.constant dense<0.000000e+00> : vector<8x384xf32>
    %12 = tpu.matmul %10, %11, %cst_8 {dimension_numbers = #tpu.dot_dimension_numbers<[1], [0], [0], [1], [0, 0, 1, 1], [], []>} : vector<8x512xbf16>, vector<512x384xbf16>, vector<8x384xf32> -> vector<8x384xf32>
    %13 = vector.extract_strided_slice %2 {offsets = [1, 0], sizes = [1, 384], strides = [1, 1]} : vector<3x512xf32> to vector<1x384xf32>
    %14 = vector.broadcast %13 : vector<1x384xf32> to vector<8x384xf32>
    %15 = arith.addf %12, %14 : vector<8x384xf32>
    %cst_9 = arith.constant 0.000000e+00 : f32
    %16 = vector.broadcast %cst_9 : f32 to vector<8x384xf32>
    %17 = arith.maximumf %15, %16 : vector<8x384xf32>
    %18 = arith.truncf %17 : vector<8x384xf32> to vector<8x384xbf16>
    %c0_10 = arith.constant 0 : index
    %c0_11 = arith.constant 0 : index
    %19 = vector.load %arg4[%c0_10, %c0_11] : memref<384x128xbf16, #tpu.memory_space<vmem>>, vector<384x128xbf16>
    %cst_12 = arith.constant dense<0.000000e+00> : vector<8x128xf32>
    %20 = tpu.matmul %18, %19, %cst_12 {dimension_numbers = #tpu.dot_dimension_numbers<[1], [0], [0], [1], [0, 0, 1, 1], [], []>} : vector<8x384xbf16>, vector<384x128xbf16>, vector<8x128xf32> -> vector<8x128xf32>
    %21 = vector.extract_strided_slice %2 {offsets = [2, 0], sizes = [1, 128], strides = [1, 1]} : vector<3x512xf32> to vector<1x128xf32>
    %22 = vector.broadcast %21 : vector<1x128xf32> to vector<8x128xf32>
    %23 = arith.addf %20, %22 : vector<8x128xf32>
    %24 = math.tanh %23 : vector<8x128xf32>
    %cst_13 = arith.constant 1.000000e+00 : f32
    %25 = vector.broadcast %cst_13 : f32 to vector<8x128xf32>
    %26 = arith.mulf %25, %24 : vector<8x128xf32>
    %c0_14 = arith.constant 0 : index
    %c0_15 = arith.constant 0 : index
    %27 = vector.load %arg6[%c0_14, %c0_15] : memref<8x128xf32, #tpu.memory_space<vmem>>, vector<8x128xf32>
    tpu.vector_store %arg6[%c0_14, %c0_15], %26 {strides = array<i32>} : memref<8x128xf32, #tpu.memory_space<vmem>>, vector<8x128xf32>,
    return
  }
  func.func @transform_0(%arg0: i32) -> (i32, i32) {
    %c0_i32 = arith.constant 0 : i32
    %c0_i32_0 = arith.constant 0 : i32
    return %arg0, %c0_i32 : i32, i32
  }
  func.func @transform_1(%arg0: i32) -> (i32, i32) {
    %c0_i32 = arith.constant 0 : i32
    %c0_i32_0 = arith.constant 0 : i32
    %c0_i32_1 = arith.constant 0 : i32
    return %c0_i32, %c0_i32_0 : i32, i32
  }
  func.func @transform_2(%arg0: i32) -> (i32, i32) {
    %c0_i32 = arith.constant 0 : i32
    %c0_i32_0 = arith.constant 0 : i32
    %c0_i32_1 = arith.constant 0 : i32
    return %c0_i32, %c0_i32_0 : i32, i32
  }
  func.func @transform_3(%arg0: i32) -> (i32, i32) {
    %c0_i32 = arith.constant 0 : i32
    %c0_i32_0 = arith.constant 0 : i32
    %c0_i32_1 = arith.constant 0 : i32
    return %c0_i32, %c0_i32_0 : i32, i32
  }
  func.func @transform_4(%arg0: i32) -> (i32, i32) {
    %c0_i32 = arith.constant 0 : i32
    %c0_i32_0 = arith.constant 0 : i32
    %c0_i32_1 = arith.constant 0 : i32
    return %c0_i32, %c0_i32_0 : i32, i32
  }
  func.func @transform_5(%arg0: i32) -> (i32, i32) {
    %c0_i32 = arith.constant 0 : i32
    %c0_i32_0 = arith.constant 0 : i32
    return %arg0, %c0_i32 : i32, i32
  }
}

</mosaic_0001>

<llo_original>
// kernel: actor_forward.1
$region0: #{actor_forward.1}
  #allocation0 [shape = 'u32[]', space=smem, size = 0x4, offset = 0x4, fixed_abs, tag = 'smem constant byte address 0x4 - core index']
  #allocation1 [shape = 'u32[72,128]{1,0:T(1,128)}', space=vmem, size = 0x9000, scoped, tag = 'internal scratch']
  %s0 = inlined_call_operand.hbm [shape: f32[8,16], index: 0, kind: input, shape index: {}]
  %s1 = inlined_call_operand.hbm [shape: bf16[16,512], index: 1, kind: input, shape index: {}]
  %s2 = inlined_call_operand.hbm [shape: bf16[512,384], index: 2, kind: input, shape index: {}]
  %s3 = inlined_call_operand.hbm [shape: bf16[384,128], index: 3, kind: input, shape index: {}]
  %s4 = inlined_call_operand.hbm [shape: f32[3,512], index: 4, kind: input, shape index: {}]
  %s5 = inlined_call_operand.hbm [shape: f32[8,128], index: 5, kind: output, shape index: {}]
  %s6 = sld [smem:[#allocation0]]
  $region50: #{actor_forward.1} parent=0
    _
  %s8 = ssub.s32 1, %s6
  %s9 = scalar_select 0, %s8, %s6
  $region1: #{actor_forward.1} parent=0
    #allocation2 [shape = 'u8[4096]{0}', space=vmem, size = 0x1000, scoped, tag = 'input window, operand 0, single buffered']
    #allocation3 [shape = 's32[1]{0}', space=sflag, size = 0x4, scoped, tag = 'scoped memory for actor_forward.1']
    #allocation4 [shape = 's32[1]{0}', space=sflag, size = 0x4, scoped, tag = 'scoped memory for actor_forward.1']
    #allocation5 [shape = 'u8[16384]{0}', space=vmem, size = 0x4000, scoped, tag = 'input window, operand 1, single buffered']
    #allocation6 [shape = 's32[1]{0}', space=sflag, size = 0x4, scoped, tag = 'scoped memory for actor_forward.1']
    #allocation7 [shape = 'u8[393216]{0}', space=vmem, size = 0x60000, scoped, tag = 'input window, operand 2, single buffered']
    #allocation8 [shape = 'u8[98304]{0}', space=vmem, size = 0x18000, scoped, tag = 'input window, operand 3, single buffered']
    #allocation9 [shape = 's32[1]{0}', space=sflag, size = 0x4, scoped, tag = 'scoped memory for actor_forward.1']
    #allocation10 [shape = 'u8[8192]{0}', space=vmem, size = 0x2000, scoped, tag = 'input window, operand 4, single buffered']
    #allocation11 [shape = 'u8[4096]{0}', space=vmem, size = 0x1000, scoped, tag = 'output window, operand 0, single buffered']
    %10 = vsyncpa [#allocation3], 0
    %11 = vsyncpa [#allocation6], 0
    %12 = vsyncpa [#allocation9], 0
    %13 = vsyncpa [#allocation4], 0
    // Predicated region
    $region2: #{actor_forward.1} parent=1 // pred_check
      _
    $region3: #{actor_forward.1} parent=1 // pred_check_branch
      %15 = sbr.rel (0) target = $region5
    $region4: #{actor_forward.1} parent=1 // pred_region
      %17 = vsyncadd [#allocation3], 0
      %s19 = sshll.u32 %s0, 4
      %s20 = int_to_ptr.hbm [resolvable:$true] %s19
      %s21 = sshll.u32 [#allocation2], 4
      %s22 = int_to_ptr.vmem [resolvable:$true] %s21
      %24 = dma.hbm_to_vmem [thread:$0]  %s20, 128, %s22, [#allocation3]
    $region5: #{actor_forward.1} parent=1 // pred_fallthru
      _
    // Predicated region
    $region6: #{actor_forward.1} parent=1 // pred_check
      _
    $region7: #{actor_forward.1} parent=1 // pred_check_branch
      %26 = sbr.rel (0) target = $region9
    $region8: #{actor_forward.1} parent=1 // pred_region
      %28 = vsyncadd [#allocation6], 0
      %s29 = sshll.u32 %s1, 4
      %s30 = int_to_ptr.hbm [resolvable:$true] %s29
      %s31 = sshll.u32 [#allocation5], 4
      %s32 = int_to_ptr.vmem [resolvable:$true] %s31
      %37 = dma.hbm_to_vmem [thread:$0]  %s30, 512, %s32, [#allocation6], 256, 256, 16
    $region9: #{actor_forward.1} parent=1 // pred_fallthru
      _
    // Predicated region
    $region10: #{actor_forward.1} parent=1 // pred_check
      _
    $region11: #{actor_forward.1} parent=1 // pred_check_branch
      %39 = sbr.rel (0) target = $region13
    $region12: #{actor_forward.1} parent=1 // pred_region
      %41 = vsyncadd [#allocation6], 0
      %s42 = sshll.u32 %s2, 4
      %s43 = int_to_ptr.hbm [resolvable:$true] %s42
      %s44 = sshll.u32 [#allocation7], 4
      %s45 = int_to_ptr.vmem [resolvable:$true] %s44
      %50 = dma.hbm_to_vmem [thread:$0]  %s43, 12288, %s45, [#allocation6], 192, 192, 12
    $region13: #{actor_forward.1} parent=1 // pred_fallthru
      _
    // Predicated region
    $region14: #{actor_forward.1} parent=1 // pred_check
      _
    $region15: #{actor_forward.1} parent=1 // pred_check_branch
      %52 = sbr.rel (0) target = $region17
    $region16: #{actor_forward.1} parent=1 // pred_region
      %54 = vsyncadd [#allocation9], 0
      %s55 = sshll.u32 %s3, 4
      %s56 = int_to_ptr.hbm [resolvable:$true] %s55
      %s57 = sshll.u32 [#allocation8], 4
      %s58 = int_to_ptr.vmem [resolvable:$true] %s57
      %63 = dma.hbm_to_vmem [thread:$0]  %s56, 3072, %s58, [#allocation9], 64, 64, 4
    $region17: #{actor_forward.1} parent=1 // pred_fallthru
      _
    // Predicated region
    $region18: #{actor_forward.1} parent=1 // pred_check
      _
    $region19: #{actor_forward.1} parent=1 // pred_check_branch
      %65 = sbr.rel (0) target = $region21
    $region20: #{actor_forward.1} parent=1 // pred_region
      %67 = vsyncadd [#allocation9], 0
      %s69 = sshll.u32 %s4, 4
      %s70 = int_to_ptr.hbm [resolvable:$true] %s69
      %s71 = sshll.u32 [#allocation10], 4
      %s72 = int_to_ptr.vmem [resolvable:$true] %s71
      %74 = dma.hbm_to_vmem [thread:$0]  %s70, 256, %s72, [#allocation9]
    $region21: #{actor_forward.1} parent=1 // pred_fallthru
      _
    // Predicated region
    $region22: #{actor_forward.1} parent=1 // pred_check
      _
    $region23: #{actor_forward.1} parent=1 // pred_check_branch
      %76 = sbr.rel (0) target = $region25
    $region24: #{actor_forward.1} parent=1 // pred_region
      %78 = dma.done [#allocation3], 128
    $region25: #{actor_forward.1} parent=1 // pred_fallthru
      _
    // Predicated region
    $region26: #{actor_forward.1} parent=1 // pred_check
      _
    $region27: #{actor_forward.1} parent=1 // pred_check_branch
      %80 = sbr.rel (0) target = $region29
    $region28: #{actor_forward.1} parent=1 // pred_region
      %82 = dma.done [#allocation6], 512
    $region29: #{actor_forward.1} parent=1 // pred_fallthru
      _
    // Predicated region
    $region30: #{actor_forward.1} parent=1 // pred_check
      _
    $region31: #{actor_forward.1} parent=1 // pred_check_branch
      %84 = sbr.rel (0) target = $region33
    $region32: #{actor_forward.1} parent=1 // pred_region
      %86 = dma.done [#allocation6], 12288
    $region33: #{actor_forward.1} parent=1 // pred_fallthru
      _
    // Predicated region
    $region34: #{actor_forward.1} parent=1 // pred_check
      _
    $region35: #{actor_forward.1} parent=1 // pred_check_branch
      %88 = sbr.rel (0) target = $region37
    $region36: #{actor_forward.1} parent=1 // pred_region
      %90 = dma.done [#allocation9], 3072
    $region37: #{actor_forward.1} parent=1 // pred_fallthru
      _
    // Predicated region
    $region38: #{actor_forward.1} parent=1 // pred_check
      _
    $region39: #{actor_forward.1} parent=1 // pred_check_branch
      %92 = sbr.rel (0) target = $region41
    $region40: #{actor_forward.1} parent=1 // pred_region
      %94 = dma.done [#allocation9], 256
    $region41: #{actor_forward.1} parent=1 // pred_fallthru
      _
    %v96 = vld [vmem:[#allocation2] sm:$0xff]
    %v97 = vpack.c.bf16 %v96, %v96
    %v98 = vld [vmem:[#allocation10] sm:$0x77]
    %v99 = vld [vmem:[#allocation10 + $0x8] sm:$0x77]
    %v100 = vld [vmem:[#allocation5] sm:$0xff]
    %v101 = vld [vmem:[#allocation5 + $0x8] sm:$0xff]
    %v102 = vld [vmem:[#allocation5 + $0x10] sm:$0xff]
    %v103 = vld [vmem:[#allocation5 + $0x18] sm:$0xff]
    %v106 = vperm.slane %v98, 0
    %v107 = vperm.slane %v98, 4
    %v108 = vperm.slane %v99, 0
    %v109 = vperm.slane %v99, 4
    %v114 = vperm.slane %v106, 0
    %v115 = vperm.slane %v107, 0
    %v116 = vperm.slane %v108, 0
    %v117 = vperm.slane %v109, 0
    %v122 = vunpack.c.l.b16 %v100
    %v123 = vunpack.c.h.b16 %v100
    %v124 = vunpack.c.l.b16 %v101
    %v125 = vunpack.c.h.b16 %v101
    %v126 = vunpack.c.l.b16 %v102
    %v127 = vunpack.c.h.b16 %v102
    %v128 = vunpack.c.l.b16 %v103
    %v129 = vunpack.c.h.b16 %v103
    %v130 = vpack.c.b16 %v126, %v122
    %v131 = vpack.c.b16 %v127, %v123
    %v132 = vpack.c.b16 %v128, %v124
    %v133 = vpack.c.b16 %v129, %v125
    %vm138 = vcmask 130048
    %v140 = vsel %vm138, %v97, 0
    %142 = vmatpush.bf16.msra.mxu0 0
    %143 = vmatpush.bf16.msra.mxu0 0
    %144 = vmatpush.bf16.msra.mxu0 0
    %145 = vmatpush.bf16.msra.mxu0 0
    %146 = vmatpush.bf16.msra.mxu0 0
    %147 = vmatpush.bf16.msra.mxu0 0
    %148 = vmatpush.bf16.msra.mxu0 0
    %149 = vmatpush.bf16.msra.mxu0 %v130
    %150 = vmatmul.bf16.gmra.mxu0 %v140
    %v151 = vpop.f32.mrf.mxu0
    %v152 = vadd.f32 %v114, %v151
    %v153 = vpop.f32.mrf.mxu0
    %154 = vdwg.mxu0
    %155 = vmatpush.bf16.msra.mxu0 0
    %156 = vmatpush.bf16.msra.mxu0 0
    %157 = vmatpush.bf16.msra.mxu0 0
    %158 = vmatpush.bf16.msra.mxu0 0
    %159 = vmatpush.bf16.msra.mxu0 0
    %160 = vmatpush.bf16.msra.mxu0 0
    %161 = vmatpush.bf16.msra.mxu0 0
    %162 = vmatpush.bf16.msra.mxu0 %v131
    %163 = vmatmul.bf16.gmra.mxu0 %v140
    %v164 = vpop.f32.mrf.mxu0
    %v165 = vadd.f32 %v115, %v164
    %v166 = vpop.f32.mrf.mxu0
    %167 = vdwg.mxu0
    %168 = vmatpush.bf16.msra.mxu0 0
    %169 = vmatpush.bf16.msra.mxu0 0
    %170 = vmatpush.bf16.msra.mxu0 0
    %171 = vmatpush.bf16.msra.mxu0 0
    %172 = vmatpush.bf16.msra.mxu0 0
    %173 = vmatpush.bf16.msra.mxu0 0
    %174 = vmatpush.bf16.msra.mxu0 0
    %175 = vmatpush.bf16.msra.mxu0 %v132
    %176 = vmatmul.bf16.gmra.mxu0 %v140
    %v177 = vpop.f32.mrf.mxu0
    %v178 = vadd.f32 %v116, %v177
    %v179 = vpop.f32.mrf.mxu0
    %180 = vdwg.mxu0
    %181 = vmatpush.bf16.msra.mxu0 0
    %182 = vmatpush.bf16.msra.mxu0 0
    %183 = vmatpush.bf16.msra.mxu0 0
    %184 = vmatpush.bf16.msra.mxu0 0
    %185 = vmatpush.bf16.msra.mxu0 0
    %186 = vmatpush.bf16.msra.mxu0 0
    %187 = vmatpush.bf16.msra.mxu0 0
    %188 = vmatpush.bf16.msra.mxu0 %v133
    %189 = vmatmul.bf16.gmra.mxu0 %v140
    %v190 = vpop.f32.mrf.mxu0
    %v191 = vadd.f32 %v117, %v190
    %v192 = vpop.f32.mrf.mxu0
    %193 = vdwg.mxu0
    %v194 = vmax.f32 %v152, 0.0
    %v195 = vmax.f32 %v165, 0.0
    %v196 = vmax.f32 %v178, 0.0
    %v197 = vmax.f32 %v191, 0.0
    %v198 = vpack.c.bf16 %v194, %v194
    %v199 = vpack.c.bf16 %v195, %v195
    %v200 = vpack.c.bf16 %v196, %v196
    %v201 = vpack.c.bf16 %v197, %v197
    %v202 = vld [vmem:[#allocation7] sm:$0xff]
    %v203 = vld [vmem:[#allocation7 + $0x8] sm:$0xf]
    %v204 = vld [vmem:[#allocation7 + $0xc] sm:$0xff]
    %v205 = vld [vmem:[#allocation7 + $0x14] sm:$0xf]
    %v206 = vld [vmem:[#allocation7 + $0x18] sm:$0xff]
    %v207 = vld [vmem:[#allocation7 + $0x20] sm:$0xf]
    %v208 = vld [vmem:[#allocation7 + $0x24] sm:$0xff]
    %v209 = vld [vmem:[#allocation7 + $0x2c] sm:$0xf]
    %v210 = vld [vmem:[#allocation7 + $0x30] sm:$0xff]
    %v211 = vld [vmem:[#allocation7 + $0x38] sm:$0xf]
    %v212 = vld [vmem:[#allocation7 + $0x3c] sm:$0xff]
    %v213 = vld [vmem:[#allocation7 + $0x44] sm:$0xf]
    %v214 = vld [vmem:[#allocation7 + $0x48] sm:$0xff]
    %v215 = vld [vmem:[#allocation7 + $0x50] sm:$0xf]
    %v216 = vld [vmem:[#allocation7 + $0x54] sm:$0xff]
    %v217 = vld [vmem:[#allocation7 + $0x5c] sm:$0xf]
    %v218 = vld [vmem:[#allocation7 + $0x60] sm:$0xff]
    %v219 = vld [vmem:[#allocation7 + $0x68] sm:$0xf]
    %v220 = vld [vmem:[#allocation7 + $0x6c] sm:$0xff]
    %v221 = vld [vmem:[#allocation7 + $0x74] sm:$0xf]
    %v222 = vld [vmem:[#allocation7 + $0x78] sm:$0xff]
    %v223 = vld [vmem:[#allocation7 + $0x80] sm:$0xf]
    %v224 = vld [vmem:[#allocation7 + $0x84] sm:$0xff]
    %v225 = vld [vmem:[#allocation7 + $0x8c] sm:$0xf]
    %v226 = vld [vmem:[#allocation7 + $0x90] sm:$0xff]
    %v227 = vld [vmem:[#allocation7 + $0x98] sm:$0xf]
    %v228 = vld [vmem:[#allocation7 + $0x9c] sm:$0xff]
    %v229 = vld [vmem:[#allocation7 + $0xa4] sm:$0xf]
    %v230 = vld [vmem:[#allocation7 + $0xa8] sm:$0xff]
    %v231 = vld [vmem:[#allocation7 + $0xb0] sm:$0xf]
    %v232 = vld [vmem:[#allocation7 + $0xb4] sm:$0xff]
    %v233 = vld [vmem:[#allocation7 + $0xbc] sm:$0xf]
    %v234 = vld [vmem:[#allocation7 + $0xc0] sm:$0xff]
    %v235 = vld [vmem:[#allocation7 + $0xc8] sm:$0xf]
    %v236 = vld [vmem:[#allocation7 + $0xcc] sm:$0xff]
    %v237 = vld [vmem:[#allocation7 + $0xd4] sm:$0xf]
    %v238 = vld [vmem:[#allocation7 + $0xd8] sm:$0xff]
    %v239 = vld [vmem:[#allocation7 + $0xe0] sm:$0xf]
    %v240 = vld [vmem:[#allocation7 + $0xe4] sm:$0xff]
    %v241 = vld [vmem:[#allocation7 + $0xec] sm:$0xf]
    %v242 = vld [vmem:[#allocation7 + $0xf0] sm:$0xff]
    %v243 = vld [vmem:[#allocation7 + $0xf8] sm:$0xf]
    %v244 = vld [vmem:[#allocation7 + $0xfc] sm:$0xff]
    %v245 = vld [vmem:[#allocation7 + $0x104] sm:$0xf]
    %v246 = vld [vmem:[#allocation7 + $0x108] sm:$0xff]
    %v247 = vld [vmem:[#allocation7 + $0x110] sm:$0xf]
    %v248 = vld [vmem:[#allocation7 + $0x114] sm:$0xff]
    %v249 = vld [vmem:[#allocation7 + $0x11c] sm:$0xf]
    %v250 = vld [vmem:[#allocation7 + $0x120] sm:$0xff]
    %v251 = vld [vmem:[#allocation7 + $0x128] sm:$0xf]
    %v252 = vld [vmem:[#allocation7 + $0x12c] sm:$0xff]
    %v253 = vld [vmem:[#allocation7 + $0x134] sm:$0xf]
    %v254 = vld [vmem:[#allocation7 + $0x138] sm:$0xff]
    %v255 = vld [vmem:[#allocation7 + $0x140] sm:$0xf]
    %v256 = vld [vmem:[#allocation7 + $0x144] sm:$0xff]
    %v257 = vld [vmem:[#allocation7 + $0x14c] sm:$0xf]
    %v258 = vld [vmem:[#allocation7 + $0x150] sm:$0xff]
    %v259 = vld [vmem:[#allocation7 + $0x158] sm:$0xf]
    %v260 = vld [vmem:[#allocation7 + $0x15c] sm:$0xff]
    %v261 = vld [vmem:[#allocation7 + $0x164] sm:$0xf]
    %v262 = vld [vmem:[#allocation7 + $0x168] sm:$0xff]
    %v263 = vld [vmem:[#allocation7 + $0x170] sm:$0xf]
    %v264 = vld [vmem:[#allocation7 + $0x174] sm:$0xff]
    %v265 = vld [vmem:[#allocation7 + $0x17c] sm:$0xf]
    %v266 = vld [vmem:[#allocation7 + $0x180] sm:$0xff]
    %v267 = vld [vmem:[#allocation7 + $0x188] sm:$0xf]
    %v268 = vld [vmem:[#allocation7 + $0x18c] sm:$0xff]
    %v269 = vld [vmem:[#allocation7 + $0x194] sm:$0xf]
    %v270 = vld [vmem:[#allocation7 + $0x198] sm:$0xff]
    %v271 = vld [vmem:[#allocation7 + $0x1a0] sm:$0xf]
    %v272 = vld [vmem:[#allocation7 + $0x1a4] sm:$0xff]
    %v273 = vld [vmem:[#allocation7 + $0x1ac] sm:$0xf]
    %v274 = vld [vmem:[#allocation7 + $0x1b0] sm:$0xff]
    %v275 = vld [vmem:[#allocation7 + $0x1b8] sm:$0xf]
    %v276 = vld [vmem:[#allocation7 + $0x1bc] sm:$0xff]
    %v277 = vld [vmem:[#allocation7 + $0x1c4] sm:$0xf]
    %v278 = vld [vmem:[#allocation7 + $0x1c8] sm:$0xff]
    %v279 = vld [vmem:[#allocation7 + $0x1d0] sm:$0xf]
    %v280 = vld [vmem:[#allocation7 + $0x1d4] sm:$0xff]
    %v281 = vld [vmem:[#allocation7 + $0x1dc] sm:$0xf]
    %v282 = vld [vmem:[#allocation7 + $0x1e0] sm:$0xff]
    %v283 = vld [vmem:[#allocation7 + $0x1e8] sm:$0xf]
    %v284 = vld [vmem:[#allocation7 + $0x1ec] sm:$0xff]
    %v285 = vld [vmem:[#allocation7 + $0x1f4] sm:$0xf]
    %v286 = vld [vmem:[#allocation7 + $0x1f8] sm:$0xff]
    %v287 = vld [vmem:[#allocation7 + $0x200] sm:$0xf]
    %v288 = vld [vmem:[#allocation7 + $0x204] sm:$0xff]
    %v289 = vld [vmem:[#allocation7 + $0x20c] sm:$0xf]
    %v290 = vld [vmem:[#allocation7 + $0x210] sm:$0xff]
    %v291 = vld [vmem:[#allocation7 + $0x218] sm:$0xf]
    %v292 = vld [vmem:[#allocation7 + $0x21c] sm:$0xff]
    %v293 = vld [vmem:[#allocation7 + $0x224] sm:$0xf]
    %v294 = vld [vmem:[#allocation7 + $0x228] sm:$0xff]
    %v295 = vld [vmem:[#allocation7 + $0x230] sm:$0xf]
    %v296 = vld [vmem:[#allocation7 + $0x234] sm:$0xff]
    %v297 = vld [vmem:[#allocation7 + $0x23c] sm:$0xf]
    %v298 = vld [vmem:[#allocation7 + $0x240] sm:$0xff]
    %v299 = vld [vmem:[#allocation7 + $0x248] sm:$0xf]
    %v300 = vld [vmem:[#allocation7 + $0x24c] sm:$0xff]
    %v301 = vld [vmem:[#allocation7 + $0x254] sm:$0xf]
    %v302 = vld [vmem:[#allocation7 + $0x258] sm:$0xff]
    %v303 = vld [vmem:[#allocation7 + $0x260] sm:$0xf]
    %v304 = vld [vmem:[#allocation7 + $0x264] sm:$0xff]
    %v305 = vld [vmem:[#allocation7 + $0x26c] sm:$0xf]
    %v306 = vld [vmem:[#allocation7 + $0x270] sm:$0xff]
    %v307 = vld [vmem:[#allocation7 + $0x278] sm:$0xf]
    %v308 = vld [vmem:[#allocation7 + $0x27c] sm:$0xff]
    %v309 = vld [vmem:[#allocation7 + $0x284] sm:$0xf]
    %v310 = vld [vmem:[#allocation7 + $0x288] sm:$0xff]
    %v311 = vld [vmem:[#allocation7 + $0x290] sm:$0xf]
    %v312 = vld [vmem:[#allocation7 + $0x294] sm:$0xff]
    %v313 = vld [vmem:[#allocation7 + $0x29c] sm:$0xf]
    %v314 = vld [vmem:[#allocation7 + $0x2a0] sm:$0xff]
    %v315 = vld [vmem:[#allocation7 + $0x2a8] sm:$0xf]
    %v316 = vld [vmem:[#allocation7 + $0x2ac] sm:$0xff]
    %v317 = vld [vmem:[#allocation7 + $0x2b4] sm:$0xf]
    %v318 = vld [vmem:[#allocation7 + $0x2b8] sm:$0xff]
    %v319 = vld [vmem:[#allocation7 + $0x2c0] sm:$0xf]
    %v320 = vld [vmem:[#allocation7 + $0x2c4] sm:$0xff]
    %v321 = vld [vmem:[#allocation7 + $0x2cc] sm:$0xf]
    %v322 = vld [vmem:[#allocation7 + $0x2d0] sm:$0xff]
    %v323 = vld [vmem:[#allocation7 + $0x2d8] sm:$0xf]
    %v324 = vld [vmem:[#allocation7 + $0x2dc] sm:$0xff]
    %v325 = vld [vmem:[#allocation7 + $0x2e4] sm:$0xf]
    %v326 = vld [vmem:[#allocation7 + $0x2e8] sm:$0xff]
    %v327 = vld [vmem:[#allocation7 + $0x2f0] sm:$0xf]
    %v328 = vld [vmem:[#allocation7 + $0x2f4] sm:$0xff]
    %v329 = vld [vmem:[#allocation7 + $0x2fc] sm:$0xf]
    %v330 = vperm.slane %v98, 1
    %v331 = vperm.slane %v98, 5
    %v332 = vperm.slane %v99, 1
    %v336 = vperm.slane %v330, 1
    %v337 = vperm.slane %v331, 1
    %v338 = vperm.slane %v332, 1
    %v467 = vunpack.c.l.b16 %v202
    %v468 = vunpack.c.h.b16 %v202
    %v469 = vunpack.c.l.b16 %v203
    %v470 = vunpack.c.l.b16 %v204
    %v471 = vunpack.c.h.b16 %v204
    %v472 = vunpack.c.l.b16 %v205
    %v473 = vunpack.c.l.b16 %v206
    %v474 = vunpack.c.h.b16 %v206
    %v475 = vunpack.c.l.b16 %v207
    %v476 = vunpack.c.l.b16 %v208
    %v477 = vunpack.c.h.b16 %v208
    %v478 = vunpack.c.l.b16 %v209
    %v479 = vunpack.c.l.b16 %v210
    %v480 = vunpack.c.h.b16 %v210
    %v481 = vunpack.c.l.b16 %v211
    %v482 = vunpack.c.l.b16 %v212
    %v483 = vunpack.c.h.b16 %v212
    %v484 = vunpack.c.l.b16 %v213
    %v485 = vunpack.c.l.b16 %v214
    %v486 = vunpack.c.h.b16 %v214
    %v487 = vunpack.c.l.b16 %v215
    %v488 = vunpack.c.l.b16 %v216
    %v489 = vunpack.c.h.b16 %v216
    %v490 = vunpack.c.l.b16 %v217
    %v491 = vunpack.c.l.b16 %v218
    %v492 = vunpack.c.h.b16 %v218
    %v493 = vunpack.c.l.b16 %v219
    %v494 = vunpack.c.l.b16 %v220
    %v495 = vunpack.c.h.b16 %v220
    %v496 = vunpack.c.l.b16 %v221
    %v497 = vunpack.c.l.b16 %v222
    %v498 = vunpack.c.h.b16 %v222
    %v499 = vunpack.c.l.b16 %v223
    %v500 = vunpack.c.l.b16 %v224
    %v501 = vunpack.c.h.b16 %v224
    %v502 = vunpack.c.l.b16 %v225
    %v503 = vunpack.c.l.b16 %v226
    %v504 = vunpack.c.h.b16 %v226
    %v505 = vunpack.c.l.b16 %v227
    %v506 = vunpack.c.l.b16 %v228
    %v507 = vunpack.c.h.b16 %v228
    %v508 = vunpack.c.l.b16 %v229
    %v509 = vunpack.c.l.b16 %v230
    %v510 = vunpack.c.h.b16 %v230
    %v511 = vunpack.c.l.b16 %v231
    %v512 = vunpack.c.l.b16 %v232
    %v513 = vunpack.c.h.b16 %v232
    %v514 = vunpack.c.l.b16 %v233
    %v515 = vunpack.c.l.b16 %v234
    %v516 = vunpack.c.h.b16 %v234
    %v517 = vunpack.c.l.b16 %v235
    %v518 = vunpack.c.l.b16 %v236
    %v519 = vunpack.c.h.b16 %v236
    %v520 = vunpack.c.l.b16 %v237
    %v521 = vunpack.c.l.b16 %v238
    %v522 = vunpack.c.h.b16 %v238
    %v523 = vunpack.c.l.b16 %v239
    %v524 = vunpack.c.l.b16 %v240
    %v525 = vunpack.c.h.b16 %v240
    %v526 = vunpack.c.l.b16 %v241
    %v527 = vunpack.c.l.b16 %v242
    %v528 = vunpack.c.h.b16 %v242
    %v529 = vunpack.c.l.b16 %v243
    %v530 = vunpack.c.l.b16 %v244
    %v531 = vunpack.c.h.b16 %v244
    %v532 = vunpack.c.l.b16 %v245
    %v533 = vunpack.c.l.b16 %v246
    %v534 = vunpack.c.h.b16 %v246
    %v535 = vunpack.c.l.b16 %v247
    %v536 = vunpack.c.l.b16 %v248
    %v537 = vunpack.c.h.b16 %v248
    %v538 = vunpack.c.l.b16 %v249
    %v539 = vunpack.c.l.b16 %v250
    %v540 = vunpack.c.h.b16 %v250
    %v541 = vunpack.c.l.b16 %v251
    %v542 = vunpack.c.l.b16 %v252
    %v543 = vunpack.c.h.b16 %v252
    %v544 = vunpack.c.l.b16 %v253
    %v545 = vunpack.c.l.b16 %v254
    %v546 = vunpack.c.h.b16 %v254
    %v547 = vunpack.c.l.b16 %v255
    %v548 = vunpack.c.l.b16 %v256
    %v549 = vunpack.c.h.b16 %v256
    %v550 = vunpack.c.l.b16 %v257
    %v551 = vunpack.c.l.b16 %v258
    %v552 = vunpack.c.h.b16 %v258
    %v553 = vunpack.c.l.b16 %v259
    %v554 = vunpack.c.l.b16 %v260
    %v555 = vunpack.c.h.b16 %v260
    %v556 = vunpack.c.l.b16 %v261
    %v557 = vunpack.c.l.b16 %v262
    %v558 = vunpack.c.h.b16 %v262
    %v559 = vunpack.c.l.b16 %v263
    %v560 = vunpack.c.l.b16 %v264
    %v561 = vunpack.c.h.b16 %v264
    %v562 = vunpack.c.l.b16 %v265
    %v563 = vunpack.c.l.b16 %v266
    %v564 = vunpack.c.h.b16 %v266
    %v565 = vunpack.c.l.b16 %v267
    %v566 = vunpack.c.l.b16 %v268
    %v567 = vunpack.c.h.b16 %v268
    %v568 = vunpack.c.l.b16 %v269
    %v569 = vunpack.c.l.b16 %v270
    %v570 = vunpack.c.h.b16 %v270
    %v571 = vunpack.c.l.b16 %v271
    %v572 = vunpack.c.l.b16 %v272
    %v573 = vunpack.c.h.b16 %v272
    %v574 = vunpack.c.l.b16 %v273
    %v575 = vunpack.c.l.b16 %v274
    %v576 = vunpack.c.h.b16 %v274
    %v577 = vunpack.c.l.b16 %v275
    %v578 = vunpack.c.l.b16 %v276
    %v579 = vunpack.c.h.b16 %v276
    %v580 = vunpack.c.l.b16 %v277
    %v581 = vunpack.c.l.b16 %v278
    %v582 = vunpack.c.h.b16 %v278
    %v583 = vunpack.c.l.b16 %v279
    %v584 = vunpack.c.l.b16 %v280
    %v585 = vunpack.c.h.b16 %v280
    %v586 = vunpack.c.l.b16 %v281
    %v587 = vunpack.c.l.b16 %v282
    %v588 = vunpack.c.h.b16 %v282
    %v589 = vunpack.c.l.b16 %v283
    %v590 = vunpack.c.l.b16 %v284
    %v591 = vunpack.c.h.b16 %v284
    %v592 = vunpack.c.l.b16 %v285
    %v593 = vunpack.c.l.b16 %v286
    %v594 = vunpack.c.h.b16 %v286
    %v595 = vunpack.c.l.b16 %v287
    %v596 = vunpack.c.l.b16 %v288
    %v597 = vunpack.c.h.b16 %v288
    %v598 = vunpack.c.l.b16 %v289
    %v599 = vunpack.c.l.b16 %v290
    %v600 = vunpack.c.h.b16 %v290
    %v601 = vunpack.c.l.b16 %v291
    %v602 = vunpack.c.l.b16 %v292
    %v603 = vunpack.c.h.b16 %v292
    %v604 = vunpack.c.l.b16 %v293
    %v605 = vunpack.c.l.b16 %v294
    %v606 = vunpack.c.h.b16 %v294
    %v607 = vunpack.c.l.b16 %v295
    %v608 = vunpack.c.l.b16 %v296
    %v609 = vunpack.c.h.b16 %v296
    %v610 = vunpack.c.l.b16 %v297
    %v611 = vunpack.c.l.b16 %v298
    %v612 = vunpack.c.h.b16 %v298
    %v613 = vunpack.c.l.b16 %v299
    %v614 = vunpack.c.l.b16 %v300
    %v615 = vunpack.c.h.b16 %v300
    %v616 = vunpack.c.l.b16 %v301
    %v617 = vunpack.c.l.b16 %v302
    %v618 = vunpack.c.h.b16 %v302
    %v619 = vunpack.c.l.b16 %v303
    %v620 = vunpack.c.l.b16 %v304
    %v621 = vunpack.c.h.b16 %v304
    %v622 = vunpack.c.l.b16 %v305
    %v623 = vunpack.c.l.b16 %v306
    %v624 = vunpack.c.h.b16 %v306
    %v625 = vunpack.c.l.b16 %v307
    %v626 = vunpack.c.l.b16 %v308
    %v627 = vunpack.c.h.b16 %v308
    %v628 = vunpack.c.l.b16 %v309
    %v629 = vunpack.c.l.b16 %v310
    %v630 = vunpack.c.h.b16 %v310
    %v631 = vunpack.c.l.b16 %v311
    %v632 = vunpack.c.l.b16 %v312
    %v633 = vunpack.c.h.b16 %v312
    %v634 = vunpack.c.l.b16 %v313
    %v635 = vunpack.c.l.b16 %v314
    %v636 = vunpack.c.h.b16 %v314
    %v637 = vunpack.c.l.b16 %v315
    %v638 = vunpack.c.l.b16 %v316
    %v639 = vunpack.c.h.b16 %v316
    %v640 = vunpack.c.l.b16 %v317
    %v641 = vunpack.c.l.b16 %v318
    %v642 = vunpack.c.h.b16 %v318
    %v643 = vunpack.c.l.b16 %v319
    %v644 = vunpack.c.l.b16 %v320
    %v645 = vunpack.c.h.b16 %v320
    %v646 = vunpack.c.l.b16 %v321
    %v647 = vunpack.c.l.b16 %v322
    %v648 = vunpack.c.h.b16 %v322
    %v649 = vunpack.c.l.b16 %v323
    %v650 = vunpack.c.l.b16 %v324
    %v651 = vunpack.c.h.b16 %v324
    %v652 = vunpack.c.l.b16 %v325
    %v653 = vunpack.c.l.b16 %v326
    %v654 = vunpack.c.h.b16 %v326
    %v655 = vunpack.c.l.b16 %v327
    %v656 = vunpack.c.l.b16 %v328
    %v657 = vunpack.c.h.b16 %v328
    %v658 = vunpack.c.l.b16 %v329
    %v659 = vpack.c.b16 %v470, %v467
    %v660 = vpack.c.b16 %v471, %v468
    %v661 = vpack.c.b16 %v472, %v469
    %v662 = vpack.c.b16 %v476, %v473
    %v663 = vpack.c.b16 %v477, %v474
    %v664 = vpack.c.b16 %v478, %v475
    %v665 = vpack.c.b16 %v482, %v479
    %v666 = vpack.c.b16 %v483, %v480
    %v667 = vpack.c.b16 %v484, %v481
    %v668 = vpack.c.b16 %v488, %v485
    %v669 = vpack.c.b16 %v489, %v486
    %v670 = vpack.c.b16 %v490, %v487
    %v671 = vpack.c.b16 %v494, %v491
    %v672 = vpack.c.b16 %v495, %v492
    %v673 = vpack.c.b16 %v496, %v493
    %v674 = vpack.c.b16 %v500, %v497
    %v675 = vpack.c.b16 %v501, %v498
    %v676 = vpack.c.b16 %v502, %v499
    %v677 = vpack.c.b16 %v506, %v503
    %v678 = vpack.c.b16 %v507, %v504
    %v679 = vpack.c.b16 %v508, %v505
    %v680 = vpack.c.b16 %v512, %v509
    %v681 = vpack.c.b16 %v513, %v510
    %v682 = vpack.c.b16 %v514, %v511
    %v683 = vpack.c.b16 %v518, %v515
    %v684 = vpack.c.b16 %v519, %v516
    %v685 = vpack.c.b16 %v520, %v517
    %v686 = vpack.c.b16 %v524, %v521
    %v687 = vpack.c.b16 %v525, %v522
    %v688 = vpack.c.b16 %v526, %v523
    %v689 = vpack.c.b16 %v530, %v527
    %v690 = vpack.c.b16 %v531, %v528
    %v691 = vpack.c.b16 %v532, %v529
    %v692 = vpack.c.b16 %v536, %v533
    %v693 = vpack.c.b16 %v537, %v534
    %v694 = vpack.c.b16 %v538, %v535
    %v695 = vpack.c.b16 %v542, %v539
    %v696 = vpack.c.b16 %v543, %v540
    %v697 = vpack.c.b16 %v544, %v541
    %v698 = vpack.c.b16 %v548, %v545
    %v699 = vpack.c.b16 %v549, %v546
    %v700 = vpack.c.b16 %v550, %v547
    %v701 = vpack.c.b16 %v554, %v551
    %v702 = vpack.c.b16 %v555, %v552
    %v703 = vpack.c.b16 %v556, %v553
    %v704 = vpack.c.b16 %v560, %v557
    %v705 = vpack.c.b16 %v561, %v558
    %v706 = vpack.c.b16 %v562, %v559
    %v707 = vpack.c.b16 %v566, %v563
    %v708 = vpack.c.b16 %v567, %v564
    %v709 = vpack.c.b16 %v568, %v565
    %v710 = vpack.c.b16 %v572, %v569
    %v711 = vpack.c.b16 %v573, %v570
    %v712 = vpack.c.b16 %v574, %v571
    %v713 = vpack.c.b16 %v578, %v575
    %v714 = vpack.c.b16 %v579, %v576
    %v715 = vpack.c.b16 %v580, %v577
    %v716 = vpack.c.b16 %v584, %v581
    %v717 = vpack.c.b16 %v585, %v582
    %v718 = vpack.c.b16 %v586, %v583
    %v719 = vpack.c.b16 %v590, %v587
    %v720 = vpack.c.b16 %v591, %v588
    %v721 = vpack.c.b16 %v592, %v589
    %v722 = vpack.c.b16 %v596, %v593
    %v723 = vpack.c.b16 %v597, %v594
    %v724 = vpack.c.b16 %v598, %v595
    %v725 = vpack.c.b16 %v602, %v599
    %v726 = vpack.c.b16 %v603, %v600
    %v727 = vpack.c.b16 %v604, %v601
    %v728 = vpack.c.b16 %v608, %v605
    %v729 = vpack.c.b16 %v609, %v606
    %v730 = vpack.c.b16 %v610, %v607
    %v731 = vpack.c.b16 %v614, %v611
    %v732 = vpack.c.b16 %v615, %v612
    %v733 = vpack.c.b16 %v616, %v613
    %v734 = vpack.c.b16 %v620, %v617
    %v735 = vpack.c.b16 %v621, %v618
    %v736 = vpack.c.b16 %v622, %v619
    %v737 = vpack.c.b16 %v626, %v623
    %v738 = vpack.c.b16 %v627, %v624
    %v739 = vpack.c.b16 %v628, %v625
    %v740 = vpack.c.b16 %v632, %v629
    %v741 = vpack.c.b16 %v633, %v630
    %v742 = vpack.c.b16 %v634, %v631
    %v743 = vpack.c.b16 %v638, %v635
    %v744 = vpack.c.b16 %v639, %v636
    %v745 = vpack.c.b16 %v640, %v637
    %v746 = vpack.c.b16 %v644, %v641
    %v747 = vpack.c.b16 %v645, %v642
    %v748 = vpack.c.b16 %v646, %v643
    %v749 = vpack.c.b16 %v650, %v647
    %v750 = vpack.c.b16 %v651, %v648
    %v751 = vpack.c.b16 %v652, %v649
    %v752 = vpack.c.b16 %v656, %v653
    %v753 = vpack.c.b16 %v657, %v654
    %v754 = vpack.c.b16 %v658, %v655
    %851 = vmatpush.bf16.msra.mxu0 %v680
    %852 = vmatpush.bf16.msra.mxu0 %v677
    %853 = vmatpush.bf16.msra.mxu0 %v674
    %854 = vmatpush.bf16.msra.mxu0 %v671
    %855 = vmatpush.bf16.msra.mxu0 %v668
    %856 = vmatpush.bf16.msra.mxu0 %v665
    %857 = vmatpush.bf16.msra.mxu0 %v662
    %858 = vmatpush.bf16.msra.mxu0 %v659
    %859 = vmatmul.bf16.gmra.mxu0 %v198
    %v860 = vpop.f32.mrf.mxu0
    %v861 = vadd.f32 %v336, %v860
    %v862 = vpop.f32.mrf.mxu0
    %863 = vdwg.mxu0
    %864 = vmatpush.bf16.msra.mxu0 %v704
    %865 = vmatpush.bf16.msra.mxu0 %v701
    %866 = vmatpush.bf16.msra.mxu0 %v698
    %867 = vmatpush.bf16.msra.mxu0 %v695
    %868 = vmatpush.bf16.msra.mxu0 %v692
    %869 = vmatpush.bf16.msra.mxu0 %v689
    %870 = vmatpush.bf16.msra.mxu0 %v686
    %871 = vmatpush.bf16.msra.mxu0 %v683
    %872 = vmatmul.bf16.gmra.mxu0 %v199
    %v873 = vpop.f32.mrf.mxu0
    %v874 = vadd.f32 %v861, %v873
    %v875 = vpop.f32.mrf.mxu0
    %876 = vdwg.mxu0
    %877 = vmatpush.bf16.msra.mxu0 %v728
    %878 = vmatpush.bf16.msra.mxu0 %v725
    %879 = vmatpush.bf16.msra.mxu0 %v722
    %880 = vmatpush.bf16.msra.mxu0 %v719
    %881 = vmatpush.bf16.msra.mxu0 %v716
    %882 = vmatpush.bf16.msra.mxu0 %v713
    %883 = vmatpush.bf16.msra.mxu0 %v710
    %884 = vmatpush.bf16.msra.mxu0 %v707
    %885 = vmatmul.bf16.gmra.mxu0 %v200
    %v886 = vpop.f32.mrf.mxu0
    %v887 = vadd.f32 %v874, %v886
    %v888 = vpop.f32.mrf.mxu0
    %889 = vdwg.mxu0
    %890 = vmatpush.bf16.msra.mxu0 %v752
    %891 = vmatpush.bf16.msra.mxu0 %v749
    %892 = vmatpush.bf16.msra.mxu0 %v746
    %893 = vmatpush.bf16.msra.mxu0 %v743
    %894 = vmatpush.bf16.msra.mxu0 %v740
    %895 = vmatpush.bf16.msra.mxu0 %v737
    %896 = vmatpush.bf16.msra.mxu0 %v734
    %897 = vmatpush.bf16.msra.mxu0 %v731
    %898 = vmatmul.bf16.gmra.mxu0 %v201
    %v899 = vpop.f32.mrf.mxu0
    %v900 = vadd.f32 %v887, %v899
    %v901 = vpop.f32.mrf.mxu0
    %902 = vdwg.mxu0
    %903 = vmatpush.bf16.msra.mxu0 %v681
    %904 = vmatpush.bf16.msra.mxu0 %v678
    %905 = vmatpush.bf16.msra.mxu0 %v675
    %906 = vmatpush.bf16.msra.mxu0 %v672
    %907 = vmatpush.bf16.msra.mxu0 %v669
    %908 = vmatpush.bf16.msra.mxu0 %v666
    %909 = vmatpush.bf16.msra.mxu0 %v663
    %910 = vmatpush.bf16.msra.mxu0 %v660
    %911 = vmatmul.bf16.gmra.mxu0 %v198
    %v912 = vpop.f32.mrf.mxu0
    %v913 = vadd.f32 %v337, %v912
    %v914 = vpop.f32.mrf.mxu0
    %915 = vdwg.mxu0
    %916 = vmatpush.bf16.msra.mxu0 %v705
    %917 = vmatpush.bf16.msra.mxu0 %v702
    %918 = vmatpush.bf16.msra.mxu0 %v699
    %919 = vmatpush.bf16.msra.mxu0 %v696
    %920 = vmatpush.bf16.msra.mxu0 %v693
    %921 = vmatpush.bf16.msra.mxu0 %v690
    %922 = vmatpush.bf16.msra.mxu0 %v687
    %923 = vmatpush.bf16.msra.mxu0 %v684
    %924 = vmatmul.bf16.gmra.mxu0 %v199
    %v925 = vpop.f32.mrf.mxu0
    %v926 = vadd.f32 %v913, %v925
    %v927 = vpop.f32.mrf.mxu0
    %928 = vdwg.mxu0
    %929 = vmatpush.bf16.msra.mxu0 %v729
    %930 = vmatpush.bf16.msra.mxu0 %v726
    %931 = vmatpush.bf16.msra.mxu0 %v723
    %932 = vmatpush.bf16.msra.mxu0 %v720
    %933 = vmatpush.bf16.msra.mxu0 %v717
    %934 = vmatpush.bf16.msra.mxu0 %v714
    %935 = vmatpush.bf16.msra.mxu0 %v711
    %936 = vmatpush.bf16.msra.mxu0 %v708
    %937 = vmatmul.bf16.gmra.mxu0 %v200
    %v938 = vpop.f32.mrf.mxu0
    %v939 = vadd.f32 %v926, %v938
    %v940 = vpop.f32.mrf.mxu0
    %941 = vdwg.mxu0
    %942 = vmatpush.bf16.msra.mxu0 %v753
    %943 = vmatpush.bf16.msra.mxu0 %v750
    %944 = vmatpush.bf16.msra.mxu0 %v747
    %945 = vmatpush.bf16.msra.mxu0 %v744
    %946 = vmatpush.bf16.msra.mxu0 %v741
    %947 = vmatpush.bf16.msra.mxu0 %v738
    %948 = vmatpush.bf16.msra.mxu0 %v735
    %949 = vmatpush.bf16.msra.mxu0 %v732
    %950 = vmatmul.bf16.gmra.mxu0 %v201
    %v951 = vpop.f32.mrf.mxu0
    %v952 = vadd.f32 %v939, %v951
    %v953 = vpop.f32.mrf.mxu0
    %954 = vdwg.mxu0
    %955 = vmatpush.bf16.msra.mxu0 %v682
    %956 = vmatpush.bf16.msra.mxu0 %v679
    %957 = vmatpush.bf16.msra.mxu0 %v676
    %958 = vmatpush.bf16.msra.mxu0 %v673
    %959 = vmatpush.bf16.msra.mxu0 %v670
    %960 = vmatpush.bf16.msra.mxu0 %v667
    %961 = vmatpush.bf16.msra.mxu0 %v664
    %962 = vmatpush.bf16.msra.mxu0 %v661
    %963 = vmatmul.bf16.gmra.mxu0 %v198
    %v964 = vpop.f32.mrf.mxu0
    %v965 = vadd.f32 %v338, %v964
    %v966 = vpop.f32.mrf.mxu0
    %967 = vdwg.mxu0
    %968 = vmatpush.bf16.msra.mxu0 %v706
    %969 = vmatpush.bf16.msra.mxu0 %v703
    %970 = vmatpush.bf16.msra.mxu0 %v700
    %971 = vmatpush.bf16.msra.mxu0 %v697
    %972 = vmatpush.bf16.msra.mxu0 %v694
    %973 = vmatpush.bf16.msra.mxu0 %v691
    %974 = vmatpush.bf16.msra.mxu0 %v688
    %975 = vmatpush.bf16.msra.mxu0 %v685
    %976 = vmatmul.bf16.gmra.mxu0 %v199
    %v977 = vpop.f32.mrf.mxu0
    %v978 = vadd.f32 %v965, %v977
    %v979 = vpop.f32.mrf.mxu0
    %980 = vdwg.mxu0
    %981 = vmatpush.bf16.msra.mxu0 %v730
    %982 = vmatpush.bf16.msra.mxu0 %v727
    %983 = vmatpush.bf16.msra.mxu0 %v724
    %984 = vmatpush.bf16.msra.mxu0 %v721
    %985 = vmatpush.bf16.msra.mxu0 %v718
    %986 = vmatpush.bf16.msra.mxu0 %v715
    %987 = vmatpush.bf16.msra.mxu0 %v712
    %988 = vmatpush.bf16.msra.mxu0 %v709
    %989 = vmatmul.bf16.gmra.mxu0 %v200
    %v990 = vpop.f32.mrf.mxu0
    %v991 = vadd.f32 %v978, %v990
    %v992 = vpop.f32.mrf.mxu0
    %993 = vdwg.mxu0
    %994 = vmatpush.bf16.msra.mxu0 %v754
    %995 = vmatpush.bf16.msra.mxu0 %v751
    %996 = vmatpush.bf16.msra.mxu0 %v748
    %997 = vmatpush.bf16.msra.mxu0 %v745
    %998 = vmatpush.bf16.msra.mxu0 %v742
    %999 = vmatpush.bf16.msra.mxu0 %v739
    %1000 = vmatpush.bf16.msra.mxu0 %v736
    %1001 = vmatpush.bf16.msra.mxu0 %v733
    %1002 = vmatmul.bf16.gmra.mxu0 %v201
    %v1003 = vpop.f32.mrf.mxu0
    %v1004 = vadd.f32 %v991, %v1003
    %v1005 = vpop.f32.mrf.mxu0
    %1006 = vdwg.mxu0
    %v1007 = vmax.f32 %v900, 0.0
    %v1008 = vmax.f32 %v952, 0.0
    %v1009 = vmax.f32 %v1004, 0.0
    %v1010 = vpack.c.bf16 %v1007, %v1007
    %v1011 = vpack.c.bf16 %v1008, %v1008
    %v1012 = vpack.c.bf16 %v1009, %v1009
    %v1013 = vld [vmem:[#allocation8] sm:$0xf]
    %v1014 = vld [vmem:[#allocation8 + $0x4] sm:$0xf]
    %v1015 = vld [vmem:[#allocation8 + $0x8] sm:$0xf]
    %v1016 = vld [vmem:[#allocation8 + $0xc] sm:$0xf]
    %v1017 = vld [vmem:[#allocation8 + $0x10] sm:$0xf]
    %v1018 = vld [vmem:[#allocation8 + $0x14] sm:$0xf]
    %v1019 = vld [vmem:[#allocation8 + $0x18] sm:$0xf]
    %v1020 = vld [vmem:[#allocation8 + $0x1c] sm:$0xf]
    %v1021 = vld [vmem:[#allocation8 + $0x20] sm:$0xf]
    %v1022 = vld [vmem:[#allocation8 + $0x24] sm:$0xf]
    %v1023 = vld [vmem:[#allocation8 + $0x28] sm:$0xf]
    %v1024 = vld [vmem:[#allocation8 + $0x2c] sm:$0xf]
    %v1025 = vld [vmem:[#allocation8 + $0x30] sm:$0xf]
    %v1026 = vld [vmem:[#allocation8 + $0x34] sm:$0xf]
    %v1027 = vld [vmem:[#allocation8 + $0x38] sm:$0xf]
    %v1028 = vld [vmem:[#allocation8 + $0x3c] sm:$0xf]
    %v1029 = vld [vmem:[#allocation8 + $0x40] sm:$0xf]
    %v1030 = vld [vmem:[#allocation8 + $0x44] sm:$0xf]
    %v1031 = vld [vmem:[#allocation8 + $0x48] sm:$0xf]
    %v1032 = vld [vmem:[#allocation8 + $0x4c] sm:$0xf]
    %v1033 = vld [vmem:[#allocation8 + $0x50] sm:$0xf]
    %v1034 = vld [vmem:[#allocation8 + $0x54] sm:$0xf]
    %v1035 = vld [vmem:[#allocation8 + $0x58] sm:$0xf]
    %v1036 = vld [vmem:[#allocation8 + $0x5c] sm:$0xf]
    %v1037 = vld [vmem:[#allocation8 + $0x60] sm:$0xf]
    %v1038 = vld [vmem:[#allocation8 + $0x64] sm:$0xf]
    %v1039 = vld [vmem:[#allocation8 + $0x68] sm:$0xf]
    %v1040 = vld [vmem:[#allocation8 + $0x6c] sm:$0xf]
    %v1041 = vld [vmem:[#allocation8 + $0x70] sm:$0xf]
    %v1042 = vld [vmem:[#allocation8 + $0x74] sm:$0xf]
    %v1043 = vld [vmem:[#allocation8 + $0x78] sm:$0xf]
    %v1044 = vld [vmem:[#allocation8 + $0x7c] sm:$0xf]
    %v1045 = vld [vmem:[#allocation8 + $0x80] sm:$0xf]
    %v1046 = vld [vmem:[#allocation8 + $0x84] sm:$0xf]
    %v1047 = vld [vmem:[#allocation8 + $0x88] sm:$0xf]
    %v1048 = vld [vmem:[#allocation8 + $0x8c] sm:$0xf]
    %v1049 = vld [vmem:[#allocation8 + $0x90] sm:$0xf]
    %v1050 = vld [vmem:[#allocation8 + $0x94] sm:$0xf]
    %v1051 = vld [vmem:[#allocation8 + $0x98] sm:$0xf]
    %v1052 = vld [vmem:[#allocation8 + $0x9c] sm:$0xf]
    %v1053 = vld [vmem:[#allocation8 + $0xa0] sm:$0xf]
    %v1054 = vld [vmem:[#allocation8 + $0xa4] sm:$0xf]
    %v1055 = vld [vmem:[#allocation8 + $0xa8] sm:$0xf]
    %v1056 = vld [vmem:[#allocation8 + $0xac] sm:$0xf]
    %v1057 = vld [vmem:[#allocation8 + $0xb0] sm:$0xf]
    %v1058 = vld [vmem:[#allocation8 + $0xb4] sm:$0xf]
    %v1059 = vld [vmem:[#allocation8 + $0xb8] sm:$0xf]
    %v1060 = vld [vmem:[#allocation8 + $0xbc] sm:$0xf]
    %v1061 = vperm.slane %v98, 2
    %v1110 = vunpack.c.l.b16 %v1013
    %v1111 = vunpack.c.l.b16 %v1014
    %v1112 = vunpack.c.l.b16 %v1015
    %v1113 = vunpack.c.l.b16 %v1016
    %v1114 = vunpack.c.l.b16 %v1017
    %v1115 = vunpack.c.l.b16 %v1018
    %v1116 = vunpack.c.l.b16 %v1019
    %v1117 = vunpack.c.l.b16 %v1020
    %v1118 = vunpack.c.l.b16 %v1021
    %v1119 = vunpack.c.l.b16 %v1022
    %v1120 = vunpack.c.l.b16 %v1023
    %v1121 = vunpack.c.l.b16 %v1024
    %v1122 = vunpack.c.l.b16 %v1025
    %v1123 = vunpack.c.l.b16 %v1026
    %v1124 = vunpack.c.l.b16 %v1027
    %v1125 = vunpack.c.l.b16 %v1028
    %v1126 = vunpack.c.l.b16 %v1029
    %v1127 = vunpack.c.l.b16 %v1030
    %v1128 = vunpack.c.l.b16 %v1031
    %v1129 = vunpack.c.l.b16 %v1032
    %v1130 = vunpack.c.l.b16 %v1033
    %v1131 = vunpack.c.l.b16 %v1034
    %v1132 = vunpack.c.l.b16 %v1035
    %v1133 = vunpack.c.l.b16 %v1036
    %v1134 = vunpack.c.l.b16 %v1037
    %v1135 = vunpack.c.l.b16 %v1038
    %v1136 = vunpack.c.l.b16 %v1039
    %v1137 = vunpack.c.l.b16 %v1040
    %v1138 = vunpack.c.l.b16 %v1041
    %v1139 = vunpack.c.l.b16 %v1042
    %v1140 = vunpack.c.l.b16 %v1043
    %v1141 = vunpack.c.l.b16 %v1044
    %v1142 = vunpack.c.l.b16 %v1045
    %v1143 = vunpack.c.l.b16 %v1046
    %v1144 = vunpack.c.l.b16 %v1047
    %v1145 = vunpack.c.l.b16 %v1048
    %v1146 = vunpack.c.l.b16 %v1049
    %v1147 = vunpack.c.l.b16 %v1050
    %v1148 = vunpack.c.l.b16 %v1051
    %v1149 = vunpack.c.l.b16 %v1052
    %v1150 = vunpack.c.l.b16 %v1053
    %v1151 = vunpack.c.l.b16 %v1054
    %v1152 = vunpack.c.l.b16 %v1055
    %v1153 = vunpack.c.l.b16 %v1056
    %v1154 = vunpack.c.l.b16 %v1057
    %v1155 = vunpack.c.l.b16 %v1058
    %v1156 = vunpack.c.l.b16 %v1059
    %v1157 = vunpack.c.l.b16 %v1060
    %v1158 = vpack.c.b16 %v1111, %v1110
    %v1159 = vpack.c.b16 %v1113, %v1112
    %v1160 = vpack.c.b16 %v1115, %v1114
    %v1161 = vpack.c.b16 %v1117, %v1116
    %v1162 = vpack.c.b16 %v1119, %v1118
    %v1163 = vpack.c.b16 %v1121, %v1120
    %v1164 = vpack.c.b16 %v1123, %v1122
    %v1165 = vpack.c.b16 %v1125, %v1124
    %v1166 = vpack.c.b16 %v1127, %v1126
    %v1167 = vpack.c.b16 %v1129, %v1128
    %v1168 = vpack.c.b16 %v1131, %v1130
    %v1169 = vpack.c.b16 %v1133, %v1132
    %v1170 = vpack.c.b16 %v1135, %v1134
    %v1171 = vpack.c.b16 %v1137, %v1136
    %v1172 = vpack.c.b16 %v1139, %v1138
    %v1173 = vpack.c.b16 %v1141, %v1140
    %v1174 = vpack.c.b16 %v1143, %v1142
    %v1175 = vpack.c.b16 %v1145, %v1144
    %v1176 = vpack.c.b16 %v1147, %v1146
    %v1177 = vpack.c.b16 %v1149, %v1148
    %v1178 = vpack.c.b16 %v1151, %v1150
    %v1179 = vpack.c.b16 %v1153, %v1152
    %v1180 = vpack.c.b16 %v1155, %v1154
    %v1181 = vpack.c.b16 %v1157, %v1156
    %1206 = vmatpush.bf16.msra.mxu0 %v1165
    %1207 = vmatpush.bf16.msra.mxu0 %v1164
    %1208 = vmatpush.bf16.msra.mxu0 %v1163
    %1209 = vmatpush.bf16.msra.mxu0 %v1162
    %1210 = vmatpush.bf16.msra.mxu0 %v1161
    %1211 = vmatpush.bf16.msra.mxu0 %v1160
    %1212 = vmatpush.bf16.msra.mxu0 %v1159
    %1213 = vmatpush.bf16.msra.mxu0 %v1158
    %1214 = vmatmul.bf16.gmra.mxu0 %v1010
    %v1215 = vpop.f32.mrf.mxu0
    %v1216 = vadd.f32 %v1061, %v1215
    %v1217 = vpop.f32.mrf.mxu0
    %1218 = vdwg.mxu0
    %1219 = vmatpush.bf16.msra.mxu0 %v1173
    %1220 = vmatpush.bf16.msra.mxu0 %v1172
    %1221 = vmatpush.bf16.msra.mxu0 %v1171
    %1222 = vmatpush.bf16.msra.mxu0 %v1170
    %1223 = vmatpush.bf16.msra.mxu0 %v1169
    %1224 = vmatpush.bf16.msra.mxu0 %v1168
    %1225 = vmatpush.bf16.msra.mxu0 %v1167
    %1226 = vmatpush.bf16.msra.mxu0 %v1166
    %1227 = vmatmul.bf16.gmra.mxu0 %v1011
    %v1228 = vpop.f32.mrf.mxu0
    %v1229 = vadd.f32 %v1216, %v1228
    %v1230 = vpop.f32.mrf.mxu0
    %1231 = vdwg.mxu0
    %1232 = vmatpush.bf16.msra.mxu0 %v1181
    %1233 = vmatpush.bf16.msra.mxu0 %v1180
    %1234 = vmatpush.bf16.msra.mxu0 %v1179
    %1235 = vmatpush.bf16.msra.mxu0 %v1178
    %1236 = vmatpush.bf16.msra.mxu0 %v1177
    %1237 = vmatpush.bf16.msra.mxu0 %v1176
    %1238 = vmatpush.bf16.msra.mxu0 %v1175
    %1239 = vmatpush.bf16.msra.mxu0 %v1174
    %1240 = vmatmul.bf16.gmra.mxu0 %v1012
    %v1241 = vpop.f32.mrf.mxu0
    %v1242 = vadd.f32 %v1229, %v1241
    %v1243 = vpop.f32.mrf.mxu0
    %1244 = vdwg.mxu0
    %v1245 = vtanh.pop %v1242
    %1246 = vst [vmem:[#allocation11] sm:$0xff] %v1245
    // Predicated region
    $region42: #{actor_forward.1} parent=1 // pred_check
      _
    $region43: #{actor_forward.1} parent=1 // pred_check_branch
      %1248 = sbr.rel (0) target = $region45
    $region44: #{actor_forward.1} parent=1 // pred_region
      %1250 = vsyncadd [#allocation4], 0
      %s1252 = sshll.u32 [#allocation11], 4
      %s1253 = int_to_ptr.vmem [resolvable:$true] %s1252
      %s1254 = sshll.u32 %s5, 4
      %s1255 = int_to_ptr.hbm [resolvable:$true] %s1254
      %1257 = dma.vmem_to_hbm [thread:$0]  %s1253, 128, %s1255, [#allocation4]
    $region45: #{actor_forward.1} parent=1 // pred_fallthru
      _
    // Predicated region
    $region46: #{actor_forward.1} parent=1 // pred_check
      _
    $region47: #{actor_forward.1} parent=1 // pred_check_branch
      %1259 = sbr.rel (0) target = $region49
    $region48: #{actor_forward.1} parent=1 // pred_region
      %1261 = dma.done [#allocation4], 128
    $region49: #{actor_forward.1} parent=1 // pred_fallthru
      _
    %1262 = vsyncpa [#allocation3], 1
    %1263 = vsyncpa [#allocation6], 1
    %1264 = vsyncpa [#allocation9], 1
    %1265 = vsyncpa [#allocation4], 1

</llo_original>
